<compile_context>
chip_gen: v7x
topology: tpu7x:2x2x1
jax: 0.10.0
libtpu: 0.0.40
codegen_flags: <defaults>
</compile_context>

<pallas_src>
import jax
import jax.numpy as jnp
from jax.experimental import pallas as pl
from jax.experimental.pallas import tpu as pltpu

N_OBS = 512
H = 128
N_ACT = 13


def _round_up(n, m):
    return ((n + m - 1) // m) * m


# --------------------------------------------------------------------------- #
# Kernel: fused 3-layer MLP, fully VMEM-resident per batch tile.
# --------------------------------------------------------------------------- #
def mlp_kernel(x_ref, w1_ref, b1_ref, w2_ref, b2_ref, w3_ref, b3_ref, o_ref):
    cd = w1_ref.dtype                         # MXU input dtype (bf16 or f32)
    x = x_ref[...].astype(cd)                 # in-kernel cast: no extra HBM pass
    h1 = jnp.dot(x, w1_ref[...], preferred_element_type=jnp.float32) + b1_ref[...]
    h1 = jnp.maximum(h1, 0.0).astype(cd)
    h2 = jnp.dot(h1, w2_ref[...], preferred_element_type=jnp.float32) + b2_ref[...]
    h2 = jnp.maximum(h2, 0.0).astype(cd)
    out = jnp.dot(h2, w3_ref[...], preferred_element_type=jnp.float32) + b3_ref[...]
    o_ref[...] = out.astype(o_ref.dtype)


# --------------------------------------------------------------------------- #
# Wrapper
# --------------------------------------------------------------------------- #
def _num_tensorcores():
    """Best-effort TensorCore count per chip (v7x has 2, v5e/v6e have 1)."""
    try:
        return max(1, int(getattr(jax.devices()[0], "num_cores", 1)))
    except Exception:
        return 1


def _choose_tile(B, tb, num_cores):
    """Batch-row tile: multiple of 8, <= tb, balanced across grid steps so the
    masked trailing block wastes < 8 rows of compute per tile.  Split across
    TensorCores only when the chip actually has >1 (v7x), and never let the
    split shrink the tile below 256 rows (M is the only MXU dim we control)."""
    tb = max(8, _round_up(min(tb, max(B, 1)), 8))
    n_steps = pl.cdiv(B, tb)
    if num_cores > 1:
        max_steps = max(1, B // 256)
        n_steps = max(n_steps, min(num_cores, max_steps))
    return max(8, _round_up(pl.cdiv(B, n_steps), 8))


def prepare_params(params, compute_dtype=jnp.bfloat16):
    """One-time weight prep (hoisted out of the forward pass): cast the
    pre-transposed [in, out] weights to the MXU compute dtype; biases stay f32."""
    return {
        "w1": jnp.asarray(params["w1"], compute_dtype),
        "w2": jnp.asarray(params["w2"], compute_dtype),
        "w3": jnp.asarray(params["w3"], compute_dtype),
        "b1": jnp.asarray(params["b1"], jnp.float32),
        "b2": jnp.asarray(params["b2"], jnp.float32),
        "b3": jnp.asarray(params["b3"], jnp.float32),
    }


def net_forward(x, prepared, *, tb=1024, num_cores=None):
    """x: [B, N_OBS] (f32 or bf16).  prepared: output of prepare_params."""
    B, F = x.shape
    assert F == N_OBS
    if num_cores is None:
        num_cores = _num_tensorcores()

    tb_eff = _choose_tile(B, tb, num_cores)
    grid = (pl.cdiv(B, tb_eff),)

    x_isz = jnp.dtype(x.dtype).itemsize
    w_isz = jnp.dtype(prepared["w1"].dtype).itemsize
    cost = pl.CostEstimate(
        flops=2 * B * (N_OBS * H + H * H + H * N_ACT),
        transcendentals=0,
        bytes_accessed=(
            x_isz * B * N_OBS                                  # x stream
            + w_isz * (N_OBS * H + H * H + H * N_ACT)          # weights
            + 4 * (2 * H + N_ACT)                              # biases (f32)
            + 4 * B * N_ACT                                    # output (f32)
        ),
    )

    # Weights / biases are tiny (~200 KiB in bf16) -> full block every grid step
    # with a constant (0, 0) index map, so they are never re-DMA'd across steps.
    full2d = lambda shape: pl.BlockSpec(shape, lambda i: (0, 0))

    return pl.pallas_call(
        mlp_kernel,
        out_shape=jax.ShapeDtypeStruct((B, N_ACT), jnp.float32),
        grid_spec=pltpu.PrefetchScalarGridSpec(
            num_scalar_prefetch=0,
            grid=grid,
            in_specs=[
                pl.BlockSpec((tb_eff, N_OBS), lambda i: (i, 0)),  # x tile
                full2d((N_OBS, H)),    # W1
                full2d((1, H)),        # b1
                full2d((H, H)),        # W2
                full2d((1, H)),        # b2
                full2d((H, N_ACT)),    # W3 (13 cols == full dim -> legal block)
                full2d((1, N_ACT)),    # b3
            ],
            out_specs=pl.BlockSpec((tb_eff, N_ACT), lambda i: (i, 0)),
        ),
        compiler_params=pltpu.CompilerParams(
            dimension_semantics=("parallel",),
            vmem_limit_bytes=32 * 1024 * 1024,  # <= physical on all of v5e/v6e/v7x
        ),
        cost_estimate=cost,
    )(x, prepared["w1"], prepared["b1"], prepared["w2"], prepared["b2"],
      prepared["w3"], prepared["b3"])


# --------------------------------------------------------------------------- #
# Reference + init (mimics torch.nn.Linear default init, weights pre-transposed)
# --------------------------------------------------------------------------- #
def init_params(key):
    ks = jax.random.split(key, 6)

    def linear(kw, kb, fan_in, fan_out):
        bound = 1.0 / jnp.sqrt(fan_in)
        w = jax.random.uniform(kw, (fan_in, fan_out), jnp.float32, -bound, bound)
        b = jax.random.uniform(kb, (1, fan_out), jnp.float32, -bound, bound)
        return w, b

    w1, b1 = linear(ks[0], ks[1], N_OBS, H)
    w2, b2 = linear(ks[2], ks[3], H, H)
    w3, b3 = linear(ks[4], ks[5], H, N_ACT)
    return {"w1": w1, "b1": b1, "w2": w2, "b2": b2, "w3": w3, "b3": b3}


def net_forward_ref(x, p):
    h1 = jnp.maximum(x @ p["w1"] + p["b1"], 0.0)
    h2 = jnp.maximum(h1 @ p["w2"] + p["b2"], 0.0)
    return h2 @ p["w3"] + p["b3"]


if __name__ == "__main__":
    key = jax.random.PRNGKey(0)
    k_param, k_x = jax.random.split(key)
    params = init_params(k_param)

    # --- f32 exact path, small even batch, single grid step -------------------
    prepared_f32 = prepare_params(params, jnp.float32)
    B = 64
    x = jax.random.normal(k_x, (B, N_OBS), jnp.float32)
    out = jax.block_until_ready(net_forward(x, prepared_f32))
    ref = net_forward_ref(x, params)
    assert out.shape == (B, N_ACT)
    assert jnp.allclose(out, ref, atol=1e-4, rtol=1e-4), "f32 mismatch vs JAX reference"

    # --- f32 path, ragged batch, small forced tile -> multi-step grid + masked
    #     trailing block (no explicit padding anywhere) -------------------------
    B2 = 200
    x2 = jax.random.normal(jax.random.PRNGKey(1), (B2, N_OBS), jnp.float32)
    out2 = jax.block_until_ready(net_forward(x2, prepared_f32, tb=64))
    ref2 = net_forward_ref(x2, params)
    assert out2.shape == (B2, N_ACT)
    assert jnp.allclose(out2, ref2, atol=1e-4, rtol=1e-4), "f32 ragged mismatch"

    # --- default bf16 MXU path (f32 accumulation), ragged batch ---------------
    # Documented precision choice: bf16 weights/activations on the MXU, f32
    # accumulation and biases -> compare loosely against the f32 reference.
    prepared_bf16 = prepare_params(params)  # bf16 weights, f32 biases
    B3 = 37
    x3 = jax.random.normal(jax.random.PRNGKey(2), (B3, N_OBS), jnp.float32)
    out3 = jax.block_until_ready(net_forward(x3, prepared_bf16))
    ref3 = net_forward_ref(x3, params)
    assert out3.shape == (B3, N_ACT)
    assert jnp.allclose(out3, ref3, atol=1e-1, rtol=1e-1), "bf16 mismatch vs JAX reference"

    print("KERNEL_OK")
</pallas_src>

<mosaic_0001>
module attributes {stable_mosaic.version = 11 : i64} {
  func.func @mlp_kernel(%arg0: i32, %arg1: memref<64x512xf32, #tpu.memory_space<vmem>>, %arg2: memref<512x128xf32, #tpu.memory_space<vmem>>, %arg3: memref<1x128xf32, #tpu.memory_space<vmem>>, %arg4: memref<128x128xf32, #tpu.memory_space<vmem>>, %arg5: memref<1x128xf32, #tpu.memory_space<vmem>>, %arg6: memref<128x13xf32, #tpu.memory_space<vmem>>, %arg7: memref<1x13xf32, #tpu.memory_space<vmem>>, %arg8: memref<64x13xf32, #tpu.memory_space<vmem>>) attributes {dimension_semantics = [#tpu.dimension_semantics<parallel>], iteration_bounds = array<i64: 1>, scalar_prefetch = 0 : i64, scratch_operands = 0 : i64, tpu.core_type = #tpu.core_type<tc>, window_params = [{transform_indices = @transform_0, window_bounds = array<i64: 64, 512>}, {pipeline_mode = #tpu.pipeline_mode<synchronous>, transform_indices = @transform_1, window_bounds = array<i64: 512, 128>}, {pipeline_mode = #tpu.pipeline_mode<synchronous>, transform_indices = @transform_2, window_bounds = array<i64: 1, 128>}, {pipeline_mode = #tpu.pipeline_mode<synchronous>, transform_indices = @transform_3, window_bounds = array<i64: 128, 128>}, {pipeline_mode = #tpu.pipeline_mode<synchronous>, transform_indices = @transform_4, window_bounds = array<i64: 1, 128>}, {pipeline_mode = #tpu.pipeline_mode<synchronous>, transform_indices = @transform_5, window_bounds = array<i64: 128, 13>}, {pipeline_mode = #tpu.pipeline_mode<synchronous>, transform_indices = @transform_6, window_bounds = array<i64: 1, 13>}, {transform_indices = @transform_7, window_bounds = array<i64: 64, 13>}]} {
    %c0 = arith.constant 0 : index
    %c0_0 = arith.constant 0 : index
    %0 = vector.load %arg1[%c0, %c0_0] : memref<64x512xf32, #tpu.memory_space<vmem>>, vector<64x512xf32>
    %c0_1 = arith.constant 0 : index
    %c0_2 = arith.constant 0 : index
    %1 = vector.load %arg2[%c0_1, %c0_2] : memref<512x128xf32, #tpu.memory_space<vmem>>, vector<512x128xf32>
    %cst = arith.constant dense<0.000000e+00> : vector<64x128xf32>
    %2 = tpu.matmul %0, %1, %cst {dimension_numbers = #tpu.dot_dimension_numbers<[1], [0], [0], [1], [0, 0, 1, 1], [], []>} : vector<64x512xf32>, vector<512x128xf32>, vector<64x128xf32> -> vector<64x128xf32>
    %c0_3 = arith.constant 0 : index
    %c0_4 = arith.constant 0 : index
    %3 = vector.load %arg3[%c0_3, %c0_4] : memref<1x128xf32, #tpu.memory_space<vmem>>, vector<1x128xf32>
    %4 = vector.broadcast %3 : vector<1x128xf32> to vector<64x128xf32>
    %5 = arith.addf %2, %4 : vector<64x128xf32>
    %cst_5 = arith.constant 0.000000e+00 : f32
    %6 = vector.broadcast %cst_5 : f32 to vector<64x128xf32>
    %7 = arith.maximumf %5, %6 : vector<64x128xf32>
    %c0_6 = arith.constant 0 : index
    %c0_7 = arith.constant 0 : index
    %8 = vector.load %arg4[%c0_6, %c0_7] : memref<128x128xf32, #tpu.memory_space<vmem>>, vector<128x128xf32>
    %cst_8 = arith.constant dense<0.000000e+00> : vector<64x128xf32>
    %9 = tpu.matmul %7, %8, %cst_8 {dimension_numbers = #tpu.dot_dimension_numbers<[1], [0], [0], [1], [0, 0, 1, 1], [], []>} : vector<64x128xf32>, vector<128x128xf32>, vector<64x128xf32> -> vector<64x128xf32>
    %c0_9 = arith.constant 0 : index
    %c0_10 = arith.constant 0 : index
    %10 = vector.load %arg5[%c0_9, %c0_10] : memref<1x128xf32, #tpu.memory_space<vmem>>, vector<1x128xf32>
    %11 = vector.broadcast %10 : vector<1x128xf32> to vector<64x128xf32>
    %12 = arith.addf %9, %11 : vector<64x128xf32>
    %cst_11 = arith.constant 0.000000e+00 : f32
    %13 = vector.broadcast %cst_11 : f32 to vector<64x128xf32>
    %14 = arith.maximumf %12, %13 : vector<64x128xf32>
    %c0_12 = arith.constant 0 : index
    %c0_13 = arith.constant 0 : index
    %15 = vector.load %arg6[%c0_12, %c0_13] : memref<128x13xf32, #tpu.memory_space<vmem>>, vector<128x13xf32>
    %cst_14 = arith.constant dense<0.000000e+00> : vector<64x13xf32>
    %16 = tpu.matmul %14, %15, %cst_14 {dimension_numbers = #tpu.dot_dimension_numbers<[1], [0], [0], [1], [0, 0, 1, 1], [], []>} : vector<64x128xf32>, vector<128x13xf32>, vector<64x13xf32> -> vector<64x13xf32>
    %c0_15 = arith.constant 0 : index
    %c0_16 = arith.constant 0 : index
    %17 = vector.load %arg7[%c0_15, %c0_16] : memref<1x13xf32, #tpu.memory_space<vmem>>, vector<1x13xf32>
    %18 = vector.broadcast %17 : vector<1x13xf32> to vector<64x13xf32>
    %19 = arith.addf %16, %18 : vector<64x13xf32>
    %c0_17 = arith.constant 0 : index
    %c0_18 = arith.constant 0 : index
    %20 = vector.load %arg8[%c0_17, %c0_18] : memref<64x13xf32, #tpu.memory_space<vmem>>, vector<64x13xf32>
    tpu.vector_store %arg8[%c0_17, %c0_18], %19 {strides = array<i32>} : memref<64x13xf32, #tpu.memory_space<vmem>>, vector<64x13xf32>,
    return
  }
  func.func @transform_0(%arg0: i32) -> (i32, i32) {
    %c0_i32 = arith.constant 0 : i32
    %c0_i32_0 = arith.constant 0 : i32
    return %arg0, %c0_i32 : i32, i32
  }
  func.func @transform_1(%arg0: i32) -> (i32, i32) {
    %c0_i32 = arith.constant 0 : i32
    %c0_i32_0 = arith.constant 0 : i32
    %c0_i32_1 = arith.constant 0 : i32
    return %c0_i32, %c0_i32_0 : i32, i32
  }
  func.func @transform_2(%arg0: i32) -> (i32, i32) {
    %c0_i32 = arith.constant 0 : i32
    %c0_i32_0 = arith.constant 0 : i32
    %c0_i32_1 = arith.constant 0 : i32
    return %c0_i32, %c0_i32_0 : i32, i32
  }
  func.func @transform_3(%arg0: i32) -> (i32, i32) {
    %c0_i32 = arith.constant 0 : i32
    %c0_i32_0 = arith.constant 0 : i32
    %c0_i32_1 = arith.constant 0 : i32
    return %c0_i32, %c0_i32_0 : i32, i32
  }
  func.func @transform_4(%arg0: i32) -> (i32, i32) {
    %c0_i32 = arith.constant 0 : i32
    %c0_i32_0 = arith.constant 0 : i32
    %c0_i32_1 = arith.constant 0 : i32
    return %c0_i32, %c0_i32_0 : i32, i32
  }
  func.func @transform_5(%arg0: i32) -> (i32, i32) {
    %c0_i32 = arith.constant 0 : i32
    %c0_i32_0 = arith.constant 0 : i32
    %c0_i32_1 = arith.constant 0 : i32
    return %c0_i32, %c0_i32_0 : i32, i32
  }
  func.func @transform_6(%arg0: i32) -> (i32, i32) {
    %c0_i32 = arith.constant 0 : i32
    %c0_i32_0 = arith.constant 0 : i32
    %c0_i32_1 = arith.constant 0 : i32
    return %c0_i32, %c0_i32_0 : i32, i32
  }
  func.func @transform_7(%arg0: i32) -> (i32, i32) {
    %c0_i32 = arith.constant 0 : i32
    %c0_i32_0 = arith.constant 0 : i32
    return %arg0, %c0_i32 : i32, i32
  }
}

</mosaic_0001>

<llo_original>
// kernel: tpu_custom_call.1
$region0: #{tpu_custom_call.1}
  #allocation0 [shape = 'u32[]', space=smem, size = 0x4, offset = 0x4, fixed_abs, tag = 'smem constant byte address 0x4 - core index']
  #allocation1 [shape = 'u32[144,128]{1,0:T(1,128)}', space=vmem, size = 0x12000, scoped, tag = 'internal scratch']
  %s0 = inlined_call_operand.hbm [shape: f32[64,512], index: 0, kind: input, shape index: {}]
  %s1 = inlined_call_operand.hbm [shape: f32[512,128], index: 1, kind: input, shape index: {}]
  %s2 = inlined_call_operand.vmem [shape: f32[1,128], index: 2, kind: input, shape index: {}]
  %s3 = inlined_call_operand.vmem [shape: f32[128,128], index: 3, kind: input, shape index: {}]
  %s4 = inlined_call_operand.vmem [shape: f32[1,128], index: 4, kind: input, shape index: {}]
  %s5 = inlined_call_operand.vmem [shape: f32[128,13], index: 5, kind: input, shape index: {}]
  %s6 = inlined_call_operand.vmem [shape: f32[1,13], index: 6, kind: input, shape index: {}]
  %s7 = inlined_call_operand.vmem [shape: f32[64,13], index: 7, kind: output, shape index: {}]
  %s8 = sld [smem:[#allocation0]]
  $region46: #{tpu_custom_call.1} parent=0
    _
  %s10 = ssub.s32 1, %s8
  %s11 = scalar_select 0, %s10, %s8
  $region1: #{tpu_custom_call.1} parent=0
    #allocation2 [shape = 'u8[131072]{0}', space=vmem, size = 0x20000, scoped, tag = 'input window, operand 0, single buffered']
    #allocation3 [shape = 's32[1]{0}', space=sflag, size = 0x4, scoped, tag = 'scoped memory for tpu_custom_call.1']
    #allocation4 [shape = 'u8[262144]{0}', space=vmem, size = 0x40000, scoped, tag = 'input window, operand 1, single buffered']
    #allocation5 [shape = 's32[1]{0}', space=sflag, size = 0x4, scoped, tag = 'scoped memory for tpu_custom_call.1']
    %12 = vsyncpa [#allocation3], 0
    %13 = vsyncpa [#allocation5], 0
    // Predicated region
    $region2: #{tpu_custom_call.1} parent=1 // pred_check
      _
    $region3: #{tpu_custom_call.1} parent=1 // pred_check_branch
      %15 = sbr.rel (0) target = $region5
    $region4: #{tpu_custom_call.1} parent=1 // pred_region
      %s17 = ssub.s32 4096, 4096
      %18 = vsyncadd [#allocation3], %s17
      %s19 = sshll.u32 [#allocation2], 4
      %s20 = int_to_ptr.vmem [resolvable:$true] %s19
      %25 = dma.hbm_to_vmem [thread:$0]  %s0, 4096, %s20, [#allocation3], 512, 512, 32
    $region5: #{tpu_custom_call.1} parent=1 // pred_fallthru
      _
    // Predicated region
    $region6: #{tpu_custom_call.1} parent=1 // pred_check
      _
    $region7: #{tpu_custom_call.1} parent=1 // pred_check_branch
      %27 = sbr.rel (0) target = $region9
    $region8: #{tpu_custom_call.1} parent=1 // pred_region
      %s29 = ssub.s32 8192, 8192
      %30 = vsyncadd [#allocation5], %s29
      %s31 = sshll.u32 [#allocation4], 4
      %s32 = int_to_ptr.vmem [resolvable:$true] %s31
      %37 = dma.hbm_to_vmem [thread:$0]  %s1, 8192, %s32, [#allocation5], 128, 128, 8
    $region9: #{tpu_custom_call.1} parent=1 // pred_fallthru
      _
    // Predicated region
    $region10: #{tpu_custom_call.1} parent=1 // pred_check
      _
    $region11: #{tpu_custom_call.1} parent=1 // pred_check_branch
      %39 = sbr.rel (0) target = $region13
    $region12: #{tpu_custom_call.1} parent=1 // pred_region
      _
    $region13: #{tpu_custom_call.1} parent=1 // pred_fallthru
      _
    // Predicated region
    $region14: #{tpu_custom_call.1} parent=1 // pred_check
      _
    $region15: #{tpu_custom_call.1} parent=1 // pred_check_branch
      %41 = sbr.rel (0) target = $region17
    $region16: #{tpu_custom_call.1} parent=1 // pred_region
      _
    $region17: #{tpu_custom_call.1} parent=1 // pred_fallthru
      _
    // Predicated region
    $region18: #{tpu_custom_call.1} parent=1 // pred_check
      _
    $region19: #{tpu_custom_call.1} parent=1 // pred_check_branch
      %43 = sbr.rel (0) target = $region21
    $region20: #{tpu_custom_call.1} parent=1 // pred_region
      _
    $region21: #{tpu_custom_call.1} parent=1 // pred_fallthru
      _
    // Predicated region
    $region22: #{tpu_custom_call.1} parent=1 // pred_check
      _
    $region23: #{tpu_custom_call.1} parent=1 // pred_check_branch
      %45 = sbr.rel (0) target = $region25
    $region24: #{tpu_custom_call.1} parent=1 // pred_region
      _
    $region25: #{tpu_custom_call.1} parent=1 // pred_fallthru
      _
    // Predicated region
    $region26: #{tpu_custom_call.1} parent=1 // pred_check
      _
    $region27: #{tpu_custom_call.1} parent=1 // pred_check_branch
      %47 = sbr.rel (0) target = $region29
    $region28: #{tpu_custom_call.1} parent=1 // pred_region
      _
    $region29: #{tpu_custom_call.1} parent=1 // pred_fallthru
      _
    // Predicated region
    $region30: #{tpu_custom_call.1} parent=1 // pred_check
      _
    $region31: #{tpu_custom_call.1} parent=1 // pred_check_branch
      %49 = sbr.rel (0) target = $region33
    $region32: #{tpu_custom_call.1} parent=1 // pred_region
      %50 = dma.done [#allocation3], 4096
    $region33: #{tpu_custom_call.1} parent=1 // pred_fallthru
      _
    // Predicated region
    $region34: #{tpu_custom_call.1} parent=1 // pred_check
      _
    $region35: #{tpu_custom_call.1} parent=1 // pred_check_branch
      %52 = sbr.rel (0) target = $region37
    $region36: #{tpu_custom_call.1} parent=1 // pred_region
      %53 = dma.done [#allocation5], 8192
    $region37: #{tpu_custom_call.1} parent=1 // pred_fallthru
      _
    %v54 = vld [vmem:[#allocation2] sm:$0xff]
    %v55 = vld [vmem:[#allocation2 + $0x8] sm:$0xff]
    %v56 = vld [vmem:[#allocation2 + $0x10] sm:$0xff]
    %v57 = vld [vmem:[#allocation2 + $0x18] sm:$0xff]
    %v58 = vld [vmem:[#allocation2 + $0x20] sm:$0xff]
    %v59 = vld [vmem:[#allocation2 + $0x28] sm:$0xff]
    %v60 = vld [vmem:[#allocation2 + $0x30] sm:$0xff]
    %v61 = vld [vmem:[#allocation2 + $0x38] sm:$0xff]
    %v62 = vld [vmem:[#allocation2 + $0x40] sm:$0xff]
    %v63 = vld [vmem:[#allocation2 + $0x48] sm:$0xff]
    %v64 = vld [vmem:[#allocation2 + $0x50] sm:$0xff]
    %v65 = vld [vmem:[#allocation2 + $0x58] sm:$0xff]
    %v66 = vld [vmem:[#allocation2 + $0x60] sm:$0xff]
    %v67 = vld [vmem:[#allocation2 + $0x68] sm:$0xff]
    %v68 = vld [vmem:[#allocation2 + $0x70] sm:$0xff]
    %v69 = vld [vmem:[#allocation2 + $0x78] sm:$0xff]
    %v70 = vld [vmem:[#allocation2 + $0x80] sm:$0xff]
    %v71 = vld [vmem:[#allocation2 + $0x88] sm:$0xff]
    %v72 = vld [vmem:[#allocation2 + $0x90] sm:$0xff]
    %v73 = vld [vmem:[#allocation2 + $0x98] sm:$0xff]
    %v74 = vld [vmem:[#allocation2 + $0xa0] sm:$0xff]
    %v75 = vld [vmem:[#allocation2 + $0xa8] sm:$0xff]
    %v76 = vld [vmem:[#allocation2 + $0xb0] sm:$0xff]
    %v77 = vld [vmem:[#allocation2 + $0xb8] sm:$0xff]
    %v78 = vld [vmem:[#allocation2 + $0xc0] sm:$0xff]
    %v79 = vld [vmem:[#allocation2 + $0xc8] sm:$0xff]
    %v80 = vld [vmem:[#allocation2 + $0xd0] sm:$0xff]
    %v81 = vld [vmem:[#allocation2 + $0xd8] sm:$0xff]
    %v82 = vld [vmem:[#allocation2 + $0xe0] sm:$0xff]
    %v83 = vld [vmem:[#allocation2 + $0xe8] sm:$0xff]
    %v84 = vld [vmem:[#allocation2 + $0xf0] sm:$0xff]
    %v85 = vld [vmem:[#allocation2 + $0xf8] sm:$0xff]
    %v86 = vld [vmem:[#allocation4] sm:$0xff]
    %v87 = vld [vmem:[#allocation4 + $0x8] sm:$0xff]
    %v88 = vld [vmem:[#allocation4 + $0x10] sm:$0xff]
    %v89 = vld [vmem:[#allocation4 + $0x18] sm:$0xff]
    %v90 = vld [vmem:[#allocation4 + $0x20] sm:$0xff]
    %v91 = vld [vmem:[#allocation4 + $0x28] sm:$0xff]
    %v92 = vld [vmem:[#allocation4 + $0x30] sm:$0xff]
    %v93 = vld [vmem:[#allocation4 + $0x38] sm:$0xff]
    %v94 = vld [vmem:[#allocation4 + $0x40] sm:$0xff]
    %v95 = vld [vmem:[#allocation4 + $0x48] sm:$0xff]
    %v96 = vld [vmem:[#allocation4 + $0x50] sm:$0xff]
    %v97 = vld [vmem:[#allocation4 + $0x58] sm:$0xff]
    %v98 = vld [vmem:[#allocation4 + $0x60] sm:$0xff]
    %v99 = vld [vmem:[#allocation4 + $0x68] sm:$0xff]
    %v100 = vld [vmem:[#allocation4 + $0x70] sm:$0xff]
    %v101 = vld [vmem:[#allocation4 + $0x78] sm:$0xff]
    %v102 = vld [vmem:[#allocation4 + $0x80] sm:$0xff]
    %v103 = vld [vmem:[#allocation4 + $0x88] sm:$0xff]
    %v104 = vld [vmem:[#allocation4 + $0x90] sm:$0xff]
    %v105 = vld [vmem:[#allocation4 + $0x98] sm:$0xff]
    %v106 = vld [vmem:[#allocation4 + $0xa0] sm:$0xff]
    %v107 = vld [vmem:[#allocation4 + $0xa8] sm:$0xff]
    %v108 = vld [vmem:[#allocation4 + $0xb0] sm:$0xff]
    %v109 = vld [vmem:[#allocation4 + $0xb8] sm:$0xff]
    %v110 = vld [vmem:[#allocation4 + $0xc0] sm:$0xff]
    %v111 = vld [vmem:[#allocation4 + $0xc8] sm:$0xff]
    %v112 = vld [vmem:[#allocation4 + $0xd0] sm:$0xff]
    %v113 = vld [vmem:[#allocation4 + $0xd8] sm:$0xff]
    %v114 = vld [vmem:[#allocation4 + $0xe0] sm:$0xff]
    %v115 = vld [vmem:[#allocation4 + $0xe8] sm:$0xff]
    %v116 = vld [vmem:[#allocation4 + $0xf0] sm:$0xff]
    %v117 = vld [vmem:[#allocation4 + $0xf8] sm:$0xff]
    %v118 = vld [vmem:[#allocation4 + $0x100] sm:$0xff]
    %v119 = vld [vmem:[#allocation4 + $0x108] sm:$0xff]
    %v120 = vld [vmem:[#allocation4 + $0x110] sm:$0xff]
    %v121 = vld [vmem:[#allocation4 + $0x118] sm:$0xff]
    %v122 = vld [vmem:[#allocation4 + $0x120] sm:$0xff]
    %v123 = vld [vmem:[#allocation4 + $0x128] sm:$0xff]
    %v124 = vld [vmem:[#allocation4 + $0x130] sm:$0xff]
    %v125 = vld [vmem:[#allocation4 + $0x138] sm:$0xff]
    %v126 = vld [vmem:[#allocation4 + $0x140] sm:$0xff]
    %v127 = vld [vmem:[#allocation4 + $0x148] sm:$0xff]
    %v128 = vld [vmem:[#allocation4 + $0x150] sm:$0xff]
    %v129 = vld [vmem:[#allocation4 + $0x158] sm:$0xff]
    %v130 = vld [vmem:[#allocation4 + $0x160] sm:$0xff]
    %v131 = vld [vmem:[#allocation4 + $0x168] sm:$0xff]
    %v132 = vld [vmem:[#allocation4 + $0x170] sm:$0xff]
    %v133 = vld [vmem:[#allocation4 + $0x178] sm:$0xff]
    %v134 = vld [vmem:[#allocation4 + $0x180] sm:$0xff]
    %v135 = vld [vmem:[#allocation4 + $0x188] sm:$0xff]
    %v136 = vld [vmem:[#allocation4 + $0x190] sm:$0xff]
    %v137 = vld [vmem:[#allocation4 + $0x198] sm:$0xff]
    %v138 = vld [vmem:[#allocation4 + $0x1a0] sm:$0xff]
    %v139 = vld [vmem:[#allocation4 + $0x1a8] sm:$0xff]
    %v140 = vld [vmem:[#allocation4 + $0x1b0] sm:$0xff]
    %v141 = vld [vmem:[#allocation4 + $0x1b8] sm:$0xff]
    %v142 = vld [vmem:[#allocation4 + $0x1c0] sm:$0xff]
    %v143 = vld [vmem:[#allocation4 + $0x1c8] sm:$0xff]
    %v144 = vld [vmem:[#allocation4 + $0x1d0] sm:$0xff]
    %v145 = vld [vmem:[#allocation4 + $0x1d8] sm:$0xff]
    %v146 = vld [vmem:[#allocation4 + $0x1e0] sm:$0xff]
    %v147 = vld [vmem:[#allocation4 + $0x1e8] sm:$0xff]
    %v148 = vld [vmem:[#allocation4 + $0x1f0] sm:$0xff]
    %v149 = vld [vmem:[#allocation4 + $0x1f8] sm:$0xff]
    %v150 = vld [vmem:[%s2] sm:$0x1]
    %v152 = vlaneseq
    %v153 = vshrl.u32 %v152, 7
    %v154 = vsub.s32 0, %v153
    %v155 = vrot.slane %v150, %v154
    %157 = vmatprep.subr.mxu0 0.0
    %158 = vmatpush1.msra.mxu0 %v86
    %159 = vmatprep.subr.mxu0 0.0
    %160 = vmatpush1.msra.mxu0 %v87
    %161 = vmatprep.subr.mxu0 0.0
    %162 = vmatpush1.msra.mxu0 %v88
    %163 = vmatprep.subr.mxu0 0.0
    %164 = vmatpush1.msra.mxu0 %v89
    %165 = vmatprep.subr.mxu0 0.0
    %166 = vmatpush1.msra.mxu0 %v90
    %167 = vmatprep.subr.mxu0 0.0
    %168 = vmatpush1.msra.mxu0 %v91
    %169 = vmatprep.subr.mxu0 0.0
    %170 = vmatpush1.msra.mxu0 %v92
    %171 = vmatprep.subr.mxu0 0.0
    %172 = vmatpush1.msra.mxu0 %v93
    %173 = vmatprep.subr.mxu0 0.0
    %174 = vmatpush1.msra.mxu0 %v94
    %175 = vmatprep.subr.mxu0 0.0
    %176 = vmatpush1.msra.mxu0 %v95
    %177 = vmatprep.subr.mxu0 0.0
    %178 = vmatpush1.msra.mxu0 %v96
    %179 = vmatprep.subr.mxu0 0.0
    %180 = vmatpush1.msra.mxu0 %v97
    %181 = vmatprep.subr.mxu0 0.0
    %182 = vmatpush1.msra.mxu0 %v98
    %183 = vmatprep.subr.mxu0 0.0
    %184 = vmatpush1.msra.mxu0 %v99
    %185 = vmatprep.subr.mxu0 0.0
    %186 = vmatpush1.msra.mxu0 %v100
    %187 = vmatprep.subr.mxu0 0.0
    %188 = vmatpush1.msra.mxu0 %v101
    %189 = vmatprep.subr.mxu0 0.0
    %190 = vmatpush1.msra.mxu0 %v102
    %191 = vmatprep.subr.mxu0 0.0
    %192 = vmatpush1.msra.mxu0 %v103
    %193 = vmatprep.subr.mxu0 0.0
    %194 = vmatpush1.msra.mxu0 %v104
    %195 = vmatprep.subr.mxu0 0.0
    %196 = vmatpush1.msra.mxu0 %v105
    %197 = vmatprep.subr.mxu0 0.0
    %198 = vmatpush1.msra.mxu0 %v106
    %199 = vmatprep.subr.mxu0 0.0
    %200 = vmatpush1.msra.mxu0 %v107
    %201 = vmatprep.subr.mxu0 0.0
    %202 = vmatpush1.msra.mxu0 %v108
    %203 = vmatprep.subr.mxu0 0.0
    %204 = vmatpush1.msra.mxu0 %v109
    %205 = vmatprep.subr.mxu0 0.0
    %206 = vmatpush1.msra.mxu0 %v110
    %207 = vmatprep.subr.mxu0 0.0
    %208 = vmatpush1.msra.mxu0 %v111
    %209 = vmatprep.subr.mxu0 0.0
    %210 = vmatpush1.msra.mxu0 %v112
    %211 = vmatprep.subr.mxu0 0.0
    %212 = vmatpush1.msra.mxu0 %v113
    %213 = vmatprep.subr.mxu0 0.0
    %214 = vmatpush1.msra.mxu0 %v114
    %215 = vmatprep.subr.mxu0 0.0
    %216 = vmatpush1.msra.mxu0 %v115
    %217 = vmatprep.subr.mxu0 0.0
    %218 = vmatpush1.msra.mxu0 %v116
    %219 = vmatprep.subr.mxu0 0.0
    %220 = vmatpush1.msra.mxu0 %v117
    %221 = vmatprep.mubr.f32.mxu0 %v55
    %222 = vmatmul.mubr.f32.gmra.mrb[0].mxu0 %v54
    %v223 = vpop.f32.mrb[0].mxu0
    %v224 = vadd.f32 %v155, %v223
    %v225 = vpop.f32.mrb[0].mxu0
    %226 = vmatprep.mubr.f32.mxu0 %v59
    %227 = vmatmul.mubr.f32.gmra.mrb[0].mxu0 %v58
    %v228 = vpop.f32.mrb[0].mxu0
    %v229 = vadd.f32 %v155, %v228
    %v230 = vpop.f32.mrb[0].mxu0
    %231 = vmatprep.mubr.f32.mxu0 %v63
    %232 = vmatmul.mubr.f32.gmra.mrb[0].mxu0 %v62
    %v233 = vpop.f32.mrb[0].mxu0
    %v234 = vadd.f32 %v155, %v233
    %v235 = vpop.f32.mrb[0].mxu0
    %236 = vmatprep.mubr.f32.mxu0 %v67
    %237 = vmatmul.mubr.f32.gmra.mrb[0].mxu0 %v66
    %v238 = vpop.f32.mrb[0].mxu0
    %v239 = vadd.f32 %v155, %v238
    %v240 = vpop.f32.mrb[0].mxu0
    %241 = vmatprep.mubr.f32.mxu0 %v71
    %242 = vmatmul.mubr.f32.gmra.mrb[0].mxu0 %v70
    %v243 = vpop.f32.mrb[0].mxu0
    %v244 = vadd.f32 %v155, %v243
    %v245 = vpop.f32.mrb[0].mxu0
    %246 = vmatprep.mubr.f32.mxu0 %v75
    %247 = vmatmul.mubr.f32.gmra.mrb[0].mxu0 %v74
    %v248 = vpop.f32.mrb[0].mxu0
    %v249 = vadd.f32 %v155, %v248
    %v250 = vpop.f32.mrb[0].mxu0
    %251 = vmatprep.mubr.f32.mxu0 %v79
    %252 = vmatmul.mubr.f32.gmra.mrb[0].mxu0 %v78
    %v253 = vpop.f32.mrb[0].mxu0
    %v254 = vadd.f32 %v155, %v253
    %v255 = vpop.f32.mrb[0].mxu0
    %256 = vmatprep.mubr.f32.mxu0 %v83
    %257 = vmatmul.mubr.f32.gmra.mrb[0].mxu0 %v82
    %v258 = vpop.f32.mrb[0].mxu0
    %v259 = vadd.f32 %v155, %v258
    %v260 = vpop.f32.mrb[0].mxu0
    %261 = vdwg.mxu0
    %262 = vmatprep.subr.mxu0 0.0
    %263 = vmatpush1.msra.mxu0 %v118
    %264 = vmatprep.subr.mxu0 0.0
    %265 = vmatpush1.msra.mxu0 %v119
    %266 = vmatprep.subr.mxu0 0.0
    %267 = vmatpush1.msra.mxu0 %v120
    %268 = vmatprep.subr.mxu0 0.0
    %269 = vmatpush1.msra.mxu0 %v121
    %270 = vmatprep.subr.mxu0 0.0
    %271 = vmatpush1.msra.mxu0 %v122
    %272 = vmatprep.subr.mxu0 0.0
    %273 = vmatpush1.msra.mxu0 %v123
    %274 = vmatprep.subr.mxu0 0.0
    %275 = vmatpush1.msra.mxu0 %v124
    %276 = vmatprep.subr.mxu0 0.0
    %277 = vmatpush1.msra.mxu0 %v125
    %278 = vmatprep.subr.mxu0 0.0
    %279 = vmatpush1.msra.mxu0 %v126
    %280 = vmatprep.subr.mxu0 0.0
    %281 = vmatpush1.msra.mxu0 %v127
    %282 = vmatprep.subr.mxu0 0.0
    %283 = vmatpush1.msra.mxu0 %v128
    %284 = vmatprep.subr.mxu0 0.0
    %285 = vmatpush1.msra.mxu0 %v129
    %286 = vmatprep.subr.mxu0 0.0
    %287 = vmatpush1.msra.mxu0 %v130
    %288 = vmatprep.subr.mxu0 0.0
    %289 = vmatpush1.msra.mxu0 %v131
    %290 = vmatprep.subr.mxu0 0.0
    %291 = vmatpush1.msra.mxu0 %v132
    %292 = vmatprep.subr.mxu0 0.0
    %293 = vmatpush1.msra.mxu0 %v133
    %294 = vmatprep.subr.mxu0 0.0
    %295 = vmatpush1.msra.mxu0 %v134
    %296 = vmatprep.subr.mxu0 0.0
    %297 = vmatpush1.msra.mxu0 %v135
    %298 = vmatprep.subr.mxu0 0.0
    %299 = vmatpush1.msra.mxu0 %v136
    %300 = vmatprep.subr.mxu0 0.0
    %301 = vmatpush1.msra.mxu0 %v137
    %302 = vmatprep.subr.mxu0 0.0
    %303 = vmatpush1.msra.mxu0 %v138
    %304 = vmatprep.subr.mxu0 0.0
    %305 = vmatpush1.msra.mxu0 %v139
    %306 = vmatprep.subr.mxu0 0.0
    %307 = vmatpush1.msra.mxu0 %v140
    %308 = vmatprep.subr.mxu0 0.0
    %309 = vmatpush1.msra.mxu0 %v141
    %310 = vmatprep.subr.mxu0 0.0
    %311 = vmatpush1.msra.mxu0 %v142
    %312 = vmatprep.subr.mxu0 0.0
    %313 = vmatpush1.msra.mxu0 %v143
    %314 = vmatprep.subr.mxu0 0.0
    %315 = vmatpush1.msra.mxu0 %v144
    %316 = vmatprep.subr.mxu0 0.0
    %317 = vmatpush1.msra.mxu0 %v145
    %318 = vmatprep.subr.mxu0 0.0
    %319 = vmatpush1.msra.mxu0 %v146
    %320 = vmatprep.subr.mxu0 0.0
    %321 = vmatpush1.msra.mxu0 %v147
    %322 = vmatprep.subr.mxu0 0.0
    %323 = vmatpush1.msra.mxu0 %v148
    %324 = vmatprep.subr.mxu0 0.0
    %325 = vmatpush1.msra.mxu0 %v149
    %326 = vmatprep.mubr.f32.mxu0 %v57
    %327 = vmatmul.mubr.f32.gmra.mrb[0].mxu0 %v56
    %v328 = vpop.f32.mrb[0].mxu0
    %v329 = vadd.f32 %v224, %v328
    %v330 = vpop.f32.mrb[0].mxu0
    %331 = vmatprep.mubr.f32.mxu0 %v61
    %332 = vmatmul.mubr.f32.gmra.mrb[0].mxu0 %v60
    %v333 = vpop.f32.mrb[0].mxu0
    %v334 = vadd.f32 %v229, %v333
    %v335 = vpop.f32.mrb[0].mxu0
    %336 = vmatprep.mubr.f32.mxu0 %v65
    %337 = vmatmul.mubr.f32.gmra.mrb[0].mxu0 %v64
    %v338 = vpop.f32.mrb[0].mxu0
    %v339 = vadd.f32 %v234, %v338
    %v340 = vpop.f32.mrb[0].mxu0
    %341 = vmatprep.mubr.f32.mxu0 %v69
    %342 = vmatmul.mubr.f32.gmra.mrb[0].mxu0 %v68
    %v343 = vpop.f32.mrb[0].mxu0
    %v344 = vadd.f32 %v239, %v343
    %v345 = vpop.f32.mrb[0].mxu0
    %346 = vmatprep.mubr.f32.mxu0 %v73
    %347 = vmatmul.mubr.f32.gmra.mrb[0].mxu0 %v72
    %v348 = vpop.f32.mrb[0].mxu0
    %v349 = vadd.f32 %v244, %v348
    %v350 = vpop.f32.mrb[0].mxu0
    %351 = vmatprep.mubr.f32.mxu0 %v77
    %352 = vmatmul.mubr.f32.gmra.mrb[0].mxu0 %v76
    %v353 = vpop.f32.mrb[0].mxu0
    %v354 = vadd.f32 %v249, %v353
    %v355 = vpop.f32.mrb[0].mxu0
    %356 = vmatprep.mubr.f32.mxu0 %v81
    %357 = vmatmul.mubr.f32.gmra.mrb[0].mxu0 %v80
    %v358 = vpop.f32.mrb[0].mxu0
    %v359 = vadd.f32 %v254, %v358
    %v360 = vpop.f32.mrb[0].mxu0
    %361 = vmatprep.mubr.f32.mxu0 %v85
    %362 = vmatmul.mubr.f32.gmra.mrb[0].mxu0 %v84
    %v363 = vpop.f32.mrb[0].mxu0
    %v364 = vadd.f32 %v259, %v363
    %v365 = vpop.f32.mrb[0].mxu0
    %366 = vdwg.mxu0
    %v367 = vmax.f32 %v329, 0.0
    %v368 = vmax.f32 %v334, 0.0
    %v369 = vmax.f32 %v339, 0.0
    %v370 = vmax.f32 %v344, 0.0
    %v371 = vmax.f32 %v349, 0.0
    %v372 = vmax.f32 %v354, 0.0
    %v373 = vmax.f32 %v359, 0.0
    %v374 = vmax.f32 %v364, 0.0
    %v375 = vld [vmem:[%s3] sm:$0xff]
    %v376 = vld [vmem:[%s3 + $0x8] sm:$0xff]
    %v377 = vld [vmem:[%s3 + $0x10] sm:$0xff]
    %v378 = vld [vmem:[%s3 + $0x18] sm:$0xff]
    %v379 = vld [vmem:[%s3 + $0x20] sm:$0xff]
    %v380 = vld [vmem:[%s3 + $0x28] sm:$0xff]
    %v381 = vld [vmem:[%s3 + $0x30] sm:$0xff]
    %v382 = vld [vmem:[%s3 + $0x38] sm:$0xff]
    %v383 = vld [vmem:[%s3 + $0x40] sm:$0xff]
    %v384 = vld [vmem:[%s3 + $0x48] sm:$0xff]
    %v385 = vld [vmem:[%s3 + $0x50] sm:$0xff]
    %v386 = vld [vmem:[%s3 + $0x58] sm:$0xff]
    %v387 = vld [vmem:[%s3 + $0x60] sm:$0xff]
    %v388 = vld [vmem:[%s3 + $0x68] sm:$0xff]
    %v389 = vld [vmem:[%s3 + $0x70] sm:$0xff]
    %v390 = vld [vmem:[%s3 + $0x78] sm:$0xff]
    %v391 = vld [vmem:[%s4] sm:$0x1]
    %v393 = vlaneseq
    %v394 = vshrl.u32 %v393, 7
    %v395 = vsub.s32 0, %v394
    %v396 = vrot.slane %v391, %v395
    %398 = vmatprep.subr.mxu0 0.0
    %399 = vmatpush1.msra.mxu0 %v375
    %400 = vmatprep.subr.mxu0 0.0
    %401 = vmatpush1.msra.mxu0 %v376
    %402 = vmatprep.subr.mxu0 0.0
    %403 = vmatpush1.msra.mxu0 %v377
    %404 = vmatprep.subr.mxu0 0.0
    %405 = vmatpush1.msra.mxu0 %v378
    %406 = vmatprep.subr.mxu0 0.0
    %407 = vmatpush1.msra.mxu0 %v379
    %408 = vmatprep.subr.mxu0 0.0
    %409 = vmatpush1.msra.mxu0 %v380
    %410 = vmatprep.subr.mxu0 0.0
    %411 = vmatpush1.msra.mxu0 %v381
    %412 = vmatprep.subr.mxu0 0.0
    %413 = vmatpush1.msra.mxu0 %v382
    %414 = vmatprep.subr.mxu0 0.0
    %415 = vmatpush1.msra.mxu0 %v383
    %416 = vmatprep.subr.mxu0 0.0
    %417 = vmatpush1.msra.mxu0 %v384
    %418 = vmatprep.subr.mxu0 0.0
    %419 = vmatpush1.msra.mxu0 %v385
    %420 = vmatprep.subr.mxu0 0.0
    %421 = vmatpush1.msra.mxu0 %v386
    %422 = vmatprep.subr.mxu0 0.0
    %423 = vmatpush1.msra.mxu0 %v387
    %424 = vmatprep.subr.mxu0 0.0
    %425 = vmatpush1.msra.mxu0 %v388
    %426 = vmatprep.subr.mxu0 0.0
    %427 = vmatpush1.msra.mxu0 %v389
    %428 = vmatprep.subr.mxu0 0.0
    %429 = vmatpush1.msra.mxu0 %v390
    %430 = vmatprep.subr.mxu0 0.0
    %431 = vmatpush1.msra.mxu0 0.0
    %432 = vmatprep.subr.mxu0 0.0
    %433 = vmatpush1.msra.mxu0 0.0
    %434 = vmatprep.subr.mxu0 0.0
    %435 = vmatpush1.msra.mxu0 0.0
    %436 = vmatprep.subr.mxu0 0.0
    %437 = vmatpush1.msra.mxu0 0.0
    %438 = vmatprep.subr.mxu0 0.0
    %439 = vmatpush1.msra.mxu0 0.0
    %440 = vmatprep.subr.mxu0 0.0
    %441 = vmatpush1.msra.mxu0 0.0
    %442 = vmatprep.subr.mxu0 0.0
    %443 = vmatpush1.msra.mxu0 0.0
    %444 = vmatprep.subr.mxu0 0.0
    %445 = vmatpush1.msra.mxu0 0.0
    %446 = vmatprep.subr.mxu0 0.0
    %447 = vmatpush1.msra.mxu0 0.0
    %448 = vmatprep.subr.mxu0 0.0
    %449 = vmatpush1.msra.mxu0 0.0
    %450 = vmatprep.subr.mxu0 0.0
    %451 = vmatpush1.msra.mxu0 0.0
    %452 = vmatprep.subr.mxu0 0.0
    %453 = vmatpush1.msra.mxu0 0.0
    %454 = vmatprep.subr.mxu0 0.0
    %455 = vmatpush1.msra.mxu0 0.0
    %456 = vmatprep.subr.mxu0 0.0
    %457 = vmatpush1.msra.mxu0 0.0
    %458 = vmatprep.subr.mxu0 0.0
    %459 = vmatpush1.msra.mxu0 0.0
    %460 = vmatprep.subr.mxu0 0.0
    %461 = vmatpush1.msra.mxu0 0.0
    %462 = vmatprep.mubr.f32.mxu0 0.0
    %463 = vmatmul.mubr.f32.gmra.mrb[0].mxu0 %v367
    %v464 = vpop.f32.mrb[0].mxu0
    %v465 = vadd.f32 %v396, %v464
    %v466 = vpop.f32.mrb[0].mxu0
    %467 = vmatprep.mubr.f32.mxu0 0.0
    %468 = vmatmul.mubr.f32.gmra.mrb[0].mxu0 %v368
    %v469 = vpop.f32.mrb[0].mxu0
    %v470 = vadd.f32 %v396, %v469
    %v471 = vpop.f32.mrb[0].mxu0
    %472 = vmatprep.mubr.f32.mxu0 0.0
    %473 = vmatmul.mubr.f32.gmra.mrb[0].mxu0 %v369
    %v474 = vpop.f32.mrb[0].mxu0
    %v475 = vadd.f32 %v396, %v474
    %v476 = vpop.f32.mrb[0].mxu0
    %477 = vmatprep.mubr.f32.mxu0 0.0
    %478 = vmatmul.mubr.f32.gmra.mrb[0].mxu0 %v370
    %v479 = vpop.f32.mrb[0].mxu0
    %v480 = vadd.f32 %v396, %v479
    %v481 = vpop.f32.mrb[0].mxu0
    %482 = vmatprep.mubr.f32.mxu0 0.0
    %483 = vmatmul.mubr.f32.gmra.mrb[0].mxu0 %v371
    %v484 = vpop.f32.mrb[0].mxu0
    %v485 = vadd.f32 %v396, %v484
    %v486 = vpop.f32.mrb[0].mxu0
    %487 = vmatprep.mubr.f32.mxu0 0.0
    %488 = vmatmul.mubr.f32.gmra.mrb[0].mxu0 %v372
    %v489 = vpop.f32.mrb[0].mxu0
    %v490 = vadd.f32 %v396, %v489
    %v491 = vpop.f32.mrb[0].mxu0
    %492 = vmatprep.mubr.f32.mxu0 0.0
    %493 = vmatmul.mubr.f32.gmra.mrb[0].mxu0 %v373
    %v494 = vpop.f32.mrb[0].mxu0
    %v495 = vadd.f32 %v396, %v494
    %v496 = vpop.f32.mrb[0].mxu0
    %497 = vmatprep.mubr.f32.mxu0 0.0
    %498 = vmatmul.mubr.f32.gmra.mrb[0].mxu0 %v374
    %v499 = vpop.f32.mrb[0].mxu0
    %v500 = vadd.f32 %v396, %v499
    %v501 = vpop.f32.mrb[0].mxu0
    %502 = vdwg.mxu0
    %v503 = vmax.f32 %v465, 0.0
    %v504 = vmax.f32 %v470, 0.0
    %v505 = vmax.f32 %v475, 0.0
    %v506 = vmax.f32 %v480, 0.0
    %v507 = vmax.f32 %v485, 0.0
    %v508 = vmax.f32 %v490, 0.0
    %v509 = vmax.f32 %v495, 0.0
    %v510 = vmax.f32 %v500, 0.0
    %v511 = vld [vmem:[%s5] sm:$0xff]
    %v512 = vld [vmem:[%s5 + $0x8] sm:$0xff]
    %v513 = vld [vmem:[%s5 + $0x10] sm:$0xff]
    %v514 = vld [vmem:[%s5 + $0x18] sm:$0xff]
    %v515 = vld [vmem:[%s5 + $0x20] sm:$0xff]
    %v516 = vld [vmem:[%s5 + $0x28] sm:$0xff]
    %v517 = vld [vmem:[%s5 + $0x30] sm:$0xff]
    %v518 = vld [vmem:[%s5 + $0x38] sm:$0xff]
    %v519 = vld [vmem:[%s5 + $0x40] sm:$0xff]
    %v520 = vld [vmem:[%s5 + $0x48] sm:$0xff]
    %v521 = vld [vmem:[%s5 + $0x50] sm:$0xff]
    %v522 = vld [vmem:[%s5 + $0x58] sm:$0xff]
    %v523 = vld [vmem:[%s5 + $0x60] sm:$0xff]
    %v524 = vld [vmem:[%s5 + $0x68] sm:$0xff]
    %v525 = vld [vmem:[%s5 + $0x70] sm:$0xff]
    %v526 = vld [vmem:[%s5 + $0x78] sm:$0xff]
    %v527 = vld [vmem:[%s6] sm:$0x1]
    %v529 = vlaneseq
    %v530 = vshrl.u32 %v529, 7
    %v531 = vsub.s32 0, %v530
    %v532 = vrot.slane %v527, %v531
    %534 = vmatprep.subr.mxu0 0.0
    %535 = vmatpush1.msra.mxu0 %v511
    %536 = vmatprep.subr.mxu0 0.0
    %537 = vmatpush1.msra.mxu0 %v512
    %538 = vmatprep.subr.mxu0 0.0
    %539 = vmatpush1.msra.mxu0 %v513
    %540 = vmatprep.subr.mxu0 0.0
    %541 = vmatpush1.msra.mxu0 %v514
    %542 = vmatprep.subr.mxu0 0.0
    %543 = vmatpush1.msra.mxu0 %v515
    %544 = vmatprep.subr.mxu0 0.0
    %545 = vmatpush1.msra.mxu0 %v516
    %546 = vmatprep.subr.mxu0 0.0
    %547 = vmatpush1.msra.mxu0 %v517
    %548 = vmatprep.subr.mxu0 0.0
    %549 = vmatpush1.msra.mxu0 %v518
    %550 = vmatprep.subr.mxu0 0.0
    %551 = vmatpush1.msra.mxu0 %v519
    %552 = vmatprep.subr.mxu0 0.0
    %553 = vmatpush1.msra.mxu0 %v520
    %554 = vmatprep.subr.mxu0 0.0
    %555 = vmatpush1.msra.mxu0 %v521
    %556 = vmatprep.subr.mxu0 0.0
    %557 = vmatpush1.msra.mxu0 %v522
    %558 = vmatprep.subr.mxu0 0.0
    %559 = vmatpush1.msra.mxu0 %v523
    %560 = vmatprep.subr.mxu0 0.0
    %561 = vmatpush1.msra.mxu0 %v524
    %562 = vmatprep.subr.mxu0 0.0
    %563 = vmatpush1.msra.mxu0 %v525
    %564 = vmatprep.subr.mxu0 0.0
    %565 = vmatpush1.msra.mxu0 %v526
    %566 = vmatprep.subr.mxu0 0.0
    %567 = vmatpush1.msra.mxu0 0.0
    %568 = vmatprep.subr.mxu0 0.0
    %569 = vmatpush1.msra.mxu0 0.0
    %570 = vmatprep.subr.mxu0 0.0
    %571 = vmatpush1.msra.mxu0 0.0
    %572 = vmatprep.subr.mxu0 0.0
    %573 = vmatpush1.msra.mxu0 0.0
    %574 = vmatprep.subr.mxu0 0.0
    %575 = vmatpush1.msra.mxu0 0.0
    %576 = vmatprep.subr.mxu0 0.0
    %577 = vmatpush1.msra.mxu0 0.0
    %578 = vmatprep.subr.mxu0 0.0
    %579 = vmatpush1.msra.mxu0 0.0
    %580 = vmatprep.subr.mxu0 0.0
    %581 = vmatpush1.msra.mxu0 0.0
    %582 = vmatprep.subr.mxu0 0.0
    %583 = vmatpush1.msra.mxu0 0.0
    %584 = vmatprep.subr.mxu0 0.0
    %585 = vmatpush1.msra.mxu0 0.0
    %586 = vmatprep.subr.mxu0 0.0
    %587 = vmatpush1.msra.mxu0 0.0
    %588 = vmatprep.subr.mxu0 0.0
    %589 = vmatpush1.msra.mxu0 0.0
    %590 = vmatprep.subr.mxu0 0.0
    %591 = vmatpush1.msra.mxu0 0.0
    %592 = vmatprep.subr.mxu0 0.0
    %593 = vmatpush1.msra.mxu0 0.0
    %594 = vmatprep.subr.mxu0 0.0
    %595 = vmatpush1.msra.mxu0 0.0
    %596 = vmatprep.subr.mxu0 0.0
    %597 = vmatpush1.msra.mxu0 0.0
    %598 = vmatprep.mubr.f32.mxu0 0.0
    %599 = vmatmul.mubr.f32.gmra.mrb[0].mxu0 %v503
    %v600 = vpop.f32.mrb[0].mxu0
    %v601 = vadd.f32 %v532, %v600
    %v602 = vpop.f32.mrb[0].mxu0
    %603 = vmatprep.mubr.f32.mxu0 0.0
    %604 = vmatmul.mubr.f32.gmra.mrb[0].mxu0 %v504
    %v605 = vpop.f32.mrb[0].mxu0
    %v606 = vadd.f32 %v532, %v605
    %v607 = vpop.f32.mrb[0].mxu0
    %608 = vmatprep.mubr.f32.mxu0 0.0
    %609 = vmatmul.mubr.f32.gmra.mrb[0].mxu0 %v505
    %v610 = vpop.f32.mrb[0].mxu0
    %v611 = vadd.f32 %v532, %v610
    %v612 = vpop.f32.mrb[0].mxu0
    %613 = vmatprep.mubr.f32.mxu0 0.0
    %614 = vmatmul.mubr.f32.gmra.mrb[0].mxu0 %v506
    %v615 = vpop.f32.mrb[0].mxu0
    %v616 = vadd.f32 %v532, %v615
    %v617 = vpop.f32.mrb[0].mxu0
    %618 = vmatprep.mubr.f32.mxu0 0.0
    %619 = vmatmul.mubr.f32.gmra.mrb[0].mxu0 %v507
    %v620 = vpop.f32.mrb[0].mxu0
    %v621 = vadd.f32 %v532, %v620
    %v622 = vpop.f32.mrb[0].mxu0
    %623 = vmatprep.mubr.f32.mxu0 0.0
    %624 = vmatmul.mubr.f32.gmra.mrb[0].mxu0 %v508
    %v625 = vpop.f32.mrb[0].mxu0
    %v626 = vadd.f32 %v532, %v625
    %v627 = vpop.f32.mrb[0].mxu0
    %628 = vmatprep.mubr.f32.mxu0 0.0
    %629 = vmatmul.mubr.f32.gmra.mrb[0].mxu0 %v509
    %v630 = vpop.f32.mrb[0].mxu0
    %v631 = vadd.f32 %v532, %v630
    %v632 = vpop.f32.mrb[0].mxu0
    %633 = vmatprep.mubr.f32.mxu0 0.0
    %634 = vmatmul.mubr.f32.gmra.mrb[0].mxu0 %v510
    %v635 = vpop.f32.mrb[0].mxu0
    %v636 = vadd.f32 %v532, %v635
    %v637 = vpop.f32.mrb[0].mxu0
    %638 = vdwg.mxu0
    %vm639 = vcmask 105472
    %640 = vst.msk [vmem:[%s7] sm:$0xff] %vm639, %v601
    %641 = vst.msk [vmem:[%s7 + $0x8] sm:$0xff] %vm639, %v606
    %642 = vst.msk [vmem:[%s7 + $0x10] sm:$0xff] %vm639, %v611
    %643 = vst.msk [vmem:[%s7 + $0x18] sm:$0xff] %vm639, %v616
    %644 = vst.msk [vmem:[%s7 + $0x20] sm:$0xff] %vm639, %v621
    %645 = vst.msk [vmem:[%s7 + $0x28] sm:$0xff] %vm639, %v626
    %646 = vst.msk [vmem:[%s7 + $0x30] sm:$0xff] %vm639, %v631
    %647 = vst.msk [vmem:[%s7 + $0x38] sm:$0xff] %vm639, %v636
    // Predicated region
    $region38: #{tpu_custom_call.1} parent=1 // pred_check
      _
    $region39: #{tpu_custom_call.1} parent=1 // pred_check_branch
      %649 = sbr.rel (0) target = $region41
    $region40: #{tpu_custom_call.1} parent=1 // pred_region
      _
    $region41: #{tpu_custom_call.1} parent=1 // pred_fallthru
      _
    // Predicated region
    $region42: #{tpu_custom_call.1} parent=1 // pred_check
      _
    $region43: #{tpu_custom_call.1} parent=1 // pred_check_branch
      %651 = sbr.rel (0) target = $region45
    $region44: #{tpu_custom_call.1} parent=1 // pred_region
      _
    $region45: #{tpu_custom_call.1} parent=1 // pred_fallthru
      _
    %652 = vsyncpa [#allocation3], 1
    %653 = vsyncpa [#allocation5], 1

</llo_original>
